<compile_context>
chip_gen: v5e
topology: v5e:2x2
jax: 0.10.0
libtpu: 0.0.40
codegen_flags: <defaults>
</compile_context>

<pallas_src>
import functools

import jax
import jax.numpy as jnp
from jax.experimental import pallas as pl
from jax.experimental.pallas import tpu as pltpu

LANE = 128
NUM_CORES = 2  # v7x has 2 TensorCores/chip; extra slice is a masked no-op on 1-TC chips


# ---------------------------------------------------------------------------
# Glue: bilinear interpolation with align_corners=True (matches F.interpolate)
# ---------------------------------------------------------------------------
def _bilinear_resize_align_corners(x, H, W):
    # x: (N, C, h, w) -> (N, C, H, W)
    N, C, h, w = x.shape
    if (h, w) == (H, W):
        return x
    ys = jnp.linspace(0.0, h - 1.0, H) if H > 1 else jnp.zeros((H,), jnp.float32)
    xs = jnp.linspace(0.0, w - 1.0, W) if W > 1 else jnp.zeros((W,), jnp.float32)
    y0 = jnp.floor(ys).astype(jnp.int32)
    x0 = jnp.floor(xs).astype(jnp.int32)
    y1 = jnp.minimum(y0 + 1, h - 1)
    x1 = jnp.minimum(x0 + 1, w - 1)
    wy = (ys - y0.astype(jnp.float32))[None, None, :, None]
    wx = (xs - x0.astype(jnp.float32))[None, None, None, :]

    x = x.astype(jnp.float32)
    top = x[:, :, y0, :]          # (N, C, H, w)
    bot = x[:, :, y1, :]          # (N, C, H, w)
    tl = top[:, :, :, x0]         # (N, C, H, W)
    tr = top[:, :, :, x1]
    bl = bot[:, :, :, x0]
    br = bot[:, :, :, x1]
    t = tl * (1.0 - wx) + tr * wx
    b = bl * (1.0 - wx) + br * wx
    return t * (1.0 - wy) + b * wy


# ---------------------------------------------------------------------------
# Pallas kernel: per-core accumulation of (real - fake)^2 into one (8,128) vreg
# ---------------------------------------------------------------------------
def _rmse_kernel(fake_ref, real_ref, out_ref, acc_ref, *, rows, steps, block_rows):
    c = pl.program_id(0)   # core slice
    i = pl.program_id(1)   # reduction step within this core's row range

    @pl.when(i == 0)
    def _():
        acc_ref[...] = jnp.zeros_like(acc_ref)

    # Logical (unclamped) row range of this iteration.
    base = (c * steps + i) * block_rows

    # Hot path: block fully inside the slab -> no iota / compare / select.
    @pl.when(base + block_rows <= rows)
    def _():
        d = real_ref[...].astype(jnp.float32) - fake_ref[...].astype(jnp.float32)
        acc_ref[...] += (d * d).reshape(-1, 8, LANE).sum(axis=0)

    # Ragged / surplus block: mask rows past the end of the slab.  Must remain
    # a SELECT (jnp.where), never a multiply: out-of-range rows may contain
    # un-DMA'd garbage (possibly NaN/Inf).
    @pl.when(base + block_rows > rows)
    def _():
        row_ids = jax.lax.broadcasted_iota(jnp.int32, (block_rows, LANE), 0) + base
        d = real_ref[...].astype(jnp.float32) - fake_ref[...].astype(jnp.float32)
        d = jnp.where(row_ids < rows, d, 0.0)
        acc_ref[...] += (d * d).reshape(-1, 8, LANE).sum(axis=0)

    @pl.when(i == pl.num_programs(1) - 1)
    def _():
        out_ref[...] = acc_ref[...].reshape(1, 8, LANE)


# Cached dimension-semantics choice (CORE_PARALLEL if the target accepts it,
# else the plain "parallel" string).
_DIM_SEMANTICS_CACHE = None


def _sublane_multiple(*dtypes):
    """Min sublane multiple of the block: 8 (32-bit), 16 (16-bit), 32 (8-bit)."""
    m = 8
    for dt in dtypes:
        bits = jnp.dtype(dt).itemsize * 8
        m = max(m, (32 // bits) * 8)
    return m


def _partial_sums(f2, r2, rows, block_rows):
    """Run the Pallas reduction over a (rows, 128) slab -> (NUM_CORES, 8, 128) partials."""
    global _DIM_SEMANTICS_CACHE

    itemsize = max(jnp.dtype(f2.dtype).itemsize, jnp.dtype(r2.dtype).itemsize)
    sub = _sublane_multiple(f2.dtype, r2.dtype)

    if block_rows is None:
        # ~2 MiB per input tile: 4096 rows f32, 8192 rows bf16, 16384 rows int8.
        block_rows = (2 * 1024 * 1024) // (LANE * itemsize)

    # Clamp the tile to the problem size; keep the sublane dim a legal multiple.
    eff_rows = min(block_rows, ((rows + sub - 1) // sub) * sub)
    eff_rows = max(sub, (eff_rows // sub) * sub)

    num_blocks = pl.cdiv(rows, eff_rows)
    steps = pl.cdiv(num_blocks, NUM_CORES)

    kernel = functools.partial(
        _rmse_kernel, rows=rows, steps=steps, block_rows=eff_rows
    )

    def in_map(c, i):
        # Surplus iterations (uneven split across cores) clamp to the last valid
        # block; their contribution is masked to zero inside the kernel.
        return (jnp.minimum(c * steps + i, num_blocks - 1), 0)

    # 2 inputs x 2 buffers x tile + small out/acc, with headroom; capped at
    # 48 MiB so it stays inside v7x's 64 MiB/TC physical VMEM.
    vmem_limit = min(48 * 1024 * 1024,
                     max(32 * 1024 * 1024,
                         4 * eff_rows * LANE * itemsize + (4 << 20)))

    cost = pl.CostEstimate(
        flops=3 * rows * LANE,
        transcendentals=0,
        bytes_accessed=2 * rows * LANE * itemsize,
    )

    def build(dim_semantics):
        return pl.pallas_call(
            kernel,
            out_shape=jax.ShapeDtypeStruct((NUM_CORES, 8, LANE), jnp.float32),
            grid_spec=pltpu.PrefetchScalarGridSpec(
                num_scalar_prefetch=0,
                grid=(NUM_CORES, steps),
                in_specs=[
                    pl.BlockSpec((eff_rows, LANE), in_map),
                    pl.BlockSpec((eff_rows, LANE), in_map),
                ],
                out_specs=pl.BlockSpec((1, 8, LANE), lambda c, i: (c, 0, 0)),
                scratch_shapes=[pltpu.VMEM((8, LANE), jnp.float32)],
            ),
            compiler_params=pltpu.CompilerParams(
                dimension_semantics=dim_semantics,
                vmem_limit_bytes=int(vmem_limit),
            ),
            cost_estimate=cost,
        )

    if _DIM_SEMANTICS_CACHE is not None:
        candidates = [_DIM_SEMANTICS_CACHE]
    else:
        candidates = []
        core_par = getattr(pltpu, "CORE_PARALLEL", None)
        arb = getattr(pltpu, "ARBITRARY", "arbitrary")
        if core_par is not None:
            candidates.append((core_par, arb))       # real 2-TC sharding on v7x
        candidates.append(("parallel", "arbitrary"))  # safe fallback everywhere

    last_err = None
    for sems in candidates:
        try:
            out = build(sems)(f2, r2)
            _DIM_SEMANTICS_CACHE = sems
            return out
        except Exception as e:  # target rejected this semantics -> try next
            last_err = e
    raise last_err


def rmse_pallas(fake, real, *, block_rows=None):
    """Pallas equivalent of the PyTorch RMSE.forward(fake, real)."""
    if fake.shape != real.shape:
        _, _, H, W = real.shape
        fake = _bilinear_resize_align_corners(fake, H, W)

    count = int(real.size)
    flat_f = fake.reshape(-1)
    flat_r = real.reshape(-1)

    rows = count // LANE            # full lane-dense rows handled by the kernel
    tail = count - rows * LANE      # <128-element remainder handled in plain JAX

    sum_sq = jnp.zeros((), jnp.float32)
    if tail:
        # Tiny tail (<128 elements): plain-JAX sum instead of padding both
        # full tensors in HBM.
        tf = flat_f[rows * LANE:].astype(jnp.float32)
        tr = flat_r[rows * LANE:].astype(jnp.float32)
        dtl = tr - tf
        sum_sq = sum_sq + jnp.sum(dtl * dtl)

    if rows > 0:
        if tail:
            # Ragged count only: XLA may materialize this prefix slice; the
            # common NCHW case (count % 128 == 0) takes the no-copy branch.
            f2 = flat_f[: rows * LANE].reshape(rows, LANE)
            r2 = flat_r[: rows * LANE].reshape(rows, LANE)
        else:
            f2 = flat_f.reshape(rows, LANE)
            r2 = flat_r.reshape(rows, LANE)
        partials = _partial_sums(f2, r2, rows, block_rows)
        sum_sq = sum_sq + jnp.sum(partials)

    # |10r - 10f|^2 = 100 * (r - f)^2  =>  sqrt(mean(.)) = 10 * sqrt(sum/count)
    return 10.0 * jnp.sqrt(sum_sq / count)


# ---------------------------------------------------------------------------
# Pure-JAX reference for sanity checking
# ---------------------------------------------------------------------------
def rmse_ref(fake, real):
    if fake.shape != real.shape:
        _, _, H, W = real.shape
        fake = _bilinear_resize_align_corners(fake, H, W)
    d = 10.0 * real.astype(jnp.float32) - 10.0 * fake.astype(jnp.float32)
    return jnp.sqrt(jnp.mean(jnp.abs(d) ** 2))


if __name__ == "__main__":
    key = jax.random.PRNGKey(0)
    k1, k2, k3, k4 = jax.random.split(key, 4)

    # fake at half resolution -> exercises the bilinear-interpolate branch
    fake = jax.random.normal(k1, (2, 4, 8, 8), dtype=jnp.float32)
    real = jax.random.normal(k2, (2, 4, 16, 16), dtype=jnp.float32)

    loss = rmse_pallas(fake, real)
    jax.block_until_ready(loss)
    ref = rmse_ref(fake, real)
    assert jnp.allclose(loss, ref, rtol=1e-5, atol=1e-5), (loss, ref)

    # same-shape (no interpolation) path, count % 128 == 0 -> zero-copy path
    fake2 = jax.random.normal(k1, (2, 4, 16, 16), dtype=jnp.float32)
    loss2 = rmse_pallas(fake2, real)
    jax.block_until_ready(loss2)
    assert jnp.allclose(loss2, rmse_ref(fake2, real), rtol=1e-5, atol=1e-5)

    # ragged element count < 128 -> pure plain-JAX tail path
    fake3 = jax.random.normal(k3, (1, 3, 5, 7), dtype=jnp.float32)
    real3 = jax.random.normal(k4, (1, 3, 5, 7), dtype=jnp.float32)
    loss3 = rmse_pallas(fake3, real3)
    jax.block_until_ready(loss3)
    assert jnp.allclose(loss3, rmse_ref(fake3, real3), rtol=1e-5, atol=1e-5)

    # ragged count with both a kernel bulk and a tail (483 = 3*128 + 99)
    fake4 = jax.random.normal(k3, (1, 3, 23, 7), dtype=jnp.float32)
    real4 = jax.random.normal(k4, (1, 3, 23, 7), dtype=jnp.float32)
    loss4 = rmse_pallas(fake4, real4)
    jax.block_until_ready(loss4)
    assert jnp.allclose(loss4, rmse_ref(fake4, real4), rtol=1e-5, atol=1e-5)

    # bf16 inputs -> dtype-aware (16,128) min tile, in-kernel f32 cast
    fake5 = jax.random.normal(k1, (2, 4, 16, 16), dtype=jnp.bfloat16)
    real5 = jax.random.normal(k2, (2, 4, 16, 16), dtype=jnp.bfloat16)
    loss5 = rmse_pallas(fake5, real5)
    jax.block_until_ready(loss5)
    assert jnp.allclose(loss5, rmse_ref(fake5, real5), rtol=2e-2, atol=2e-2)

    print("KERNEL_OK")
</pallas_src>

<mosaic_0001>
module attributes {stable_mosaic.version = 11 : i64} {
  func.func @_rmse_kernel(%arg0: i32, %arg1: i32, %arg2: memref<16x128xf32, #tpu.memory_space<vmem>>, %arg3: memref<16x128xf32, #tpu.memory_space<vmem>>, %arg4: memref<1x8x128xf32, #tpu.memory_space<vmem>>, %arg5: memref<8x128xf32, #tpu.memory_space<vmem>>) attributes {dimension_semantics = [#tpu.dimension_semantics<core_parallel>, #tpu.dimension_semantics<arbitrary>], iteration_bounds = array<i64: 2, 1>, scalar_prefetch = 0 : i64, scratch_operands = 1 : i64, tpu.core_type = #tpu.core_type<tc>, window_params = [{transform_indices = @transform_0, window_bounds = array<i64: 16, 128>}, {transform_indices = @transform_1, window_bounds = array<i64: 16, 128>}, {transform_indices = @transform_2, window_bounds = array<i64: 1, 8, 128>}]} {
    %c0_i32 = arith.constant 0 : i32
    %0 = arith.cmpi eq, %arg1, %c0_i32 : i32
    %1 = arith.extui %0 : i1 to i32
    %c0_i32_0 = arith.constant 0 : i32
    %2 = arith.cmpi ne, %1, %c0_i32_0 : i32
    scf.if %2 {
      %cst = arith.constant 0.000000e+00 : f32
      %17 = vector.broadcast %cst : f32 to vector<8x128xf32>
      %c0 = arith.constant 0 : index
      %c0_9 = arith.constant 0 : index
      %18 = vector.load %arg5[%c0, %c0_9] : memref<8x128xf32, #tpu.memory_space<vmem>>, vector<8x128xf32>
      tpu.vector_store %arg5[%c0, %c0_9], %17 {strides = array<i32>} : memref<8x128xf32, #tpu.memory_space<vmem>>, vector<8x128xf32>,
    } else {
    }
    %c1_i32 = arith.constant 1 : i32
    %3 = arith.muli %arg0, %c1_i32 : i32
    %4 = arith.addi %3, %arg1 : i32
    %c16_i32 = arith.constant 16 : i32
    %5 = arith.muli %4, %c16_i32 : i32
    %c16_i32_1 = arith.constant 16 : i32
    %6 = arith.addi %5, %c16_i32_1 : i32
    %c16_i32_2 = arith.constant 16 : i32
    %7 = arith.cmpi sle, %6, %c16_i32_2 : i32
    %8 = arith.extui %7 : i1 to i32
    %c0_i32_3 = arith.constant 0 : i32
    %9 = arith.cmpi ne, %8, %c0_i32_3 : i32
    scf.if %9 {
      %c0 = arith.constant 0 : index
      %c0_9 = arith.constant 0 : index
      %17 = vector.load %arg3[%c0, %c0_9] : memref<16x128xf32, #tpu.memory_space<vmem>>, vector<16x128xf32>
      %c0_10 = arith.constant 0 : index
      %c0_11 = arith.constant 0 : index
      %18 = vector.load %arg2[%c0_10, %c0_11] : memref<16x128xf32, #tpu.memory_space<vmem>>, vector<16x128xf32>
      %19 = arith.subf %17, %18 : vector<16x128xf32>
      %c0_12 = arith.constant 0 : index
      %c0_13 = arith.constant 0 : index
      %20 = vector.load %arg5[%c0_12, %c0_13] : memref<8x128xf32, #tpu.memory_space<vmem>>, vector<8x128xf32>
      %21 = arith.mulf %19, %19 : vector<16x128xf32>
      %22 = vector.shape_cast %21 : vector<16x128xf32> to vector<2x8x128xf32>
      %cst = arith.constant dense<0.000000e+00> : vector<8x128xf32>
      %23 = vector.multi_reduction <add>, %22, %cst [0] : vector<2x8x128xf32> to vector<8x128xf32>
      %24 = arith.addf %20, %23 : vector<8x128xf32>
      %c0_14 = arith.constant 0 : index
      %c0_15 = arith.constant 0 : index
      %25 = vector.load %arg5[%c0_14, %c0_15] : memref<8x128xf32, #tpu.memory_space<vmem>>, vector<8x128xf32>
      tpu.vector_store %arg5[%c0_14, %c0_15], %24 {strides = array<i32>} : memref<8x128xf32, #tpu.memory_space<vmem>>, vector<8x128xf32>,
    } else {
    }
    %c16_i32_4 = arith.constant 16 : i32
    %10 = arith.addi %5, %c16_i32_4 : i32
    %c16_i32_5 = arith.constant 16 : i32
    %11 = arith.cmpi sgt, %10, %c16_i32_5 : i32
    %12 = arith.extui %11 : i1 to i32
    %c0_i32_6 = arith.constant 0 : i32
    %13 = arith.cmpi ne, %12, %c0_i32_6 : i32
    scf.if %13 {
      %17 = tpu.iota {dimensions = array<i32: 0>} : vector<16x128xi32>
      %18 = vector.broadcast %5 : i32 to vector<16x128xi32>
      %19 = arith.addi %17, %18 : vector<16x128xi32>
      %c0 = arith.constant 0 : index
      %c0_9 = arith.constant 0 : index
      %20 = vector.load %arg3[%c0, %c0_9] : memref<16x128xf32, #tpu.memory_space<vmem>>, vector<16x128xf32>
      %c0_10 = arith.constant 0 : index
      %c0_11 = arith.constant 0 : index
      %21 = vector.load %arg2[%c0_10, %c0_11] : memref<16x128xf32, #tpu.memory_space<vmem>>, vector<16x128xf32>
      %22 = arith.subf %20, %21 : vector<16x128xf32>
      %c16_i32_12 = arith.constant 16 : i32
      %23 = vector.broadcast %c16_i32_12 : i32 to vector<16x128xi32>
      %24 = arith.cmpi slt, %19, %23 : vector<16x128xi32>
      %cst = arith.constant 0.000000e+00 : f32
      %25 = vector.broadcast %cst : f32 to vector<16x128xf32>
      %26 = arith.select %24, %22, %25 : vector<16x128xi1>, vector<16x128xf32>
      %c0_13 = arith.constant 0 : index
      %c0_14 = arith.constant 0 : index
      %27 = vector.load %arg5[%c0_13, %c0_14] : memref<8x128xf32, #tpu.memory_space<vmem>>, vector<8x128xf32>
      %28 = arith.mulf %26, %26 : vector<16x128xf32>
      %29 = vector.shape_cast %28 : vector<16x128xf32> to vector<2x8x128xf32>
      %cst_15 = arith.constant dense<0.000000e+00> : vector<8x128xf32>
      %30 = vector.multi_reduction <add>, %29, %cst_15 [0] : vector<2x8x128xf32> to vector<8x128xf32>
      %31 = arith.addf %27, %30 : vector<8x128xf32>
      %c0_16 = arith.constant 0 : index
      %c0_17 = arith.constant 0 : index
      %32 = vector.load %arg5[%c0_16, %c0_17] : memref<8x128xf32, #tpu.memory_space<vmem>>, vector<8x128xf32>
      tpu.vector_store %arg5[%c0_16, %c0_17], %31 {strides = array<i32>} : memref<8x128xf32, #tpu.memory_space<vmem>>, vector<8x128xf32>,
    } else {
    }
    %c0_i32_7 = arith.constant 0 : i32
    %14 = arith.cmpi eq, %arg1, %c0_i32_7 : i32
    %15 = arith.extui %14 : i1 to i32
    %c0_i32_8 = arith.constant 0 : i32
    %16 = arith.cmpi ne, %15, %c0_i32_8 : i32
    scf.if %16 {
      %c0 = arith.constant 0 : index
      %c0_9 = arith.constant 0 : index
      %17 = vector.load %arg5[%c0, %c0_9] : memref<8x128xf32, #tpu.memory_space<vmem>>, vector<8x128xf32>
      %18 = vector.shape_cast %17 : vector<8x128xf32> to vector<1x8x128xf32>
      %c0_10 = arith.constant 0 : index
      %c0_11 = arith.constant 0 : index
      %c0_12 = arith.constant 0 : index
      %19 = vector.load %arg4[%c0_10, %c0_11, %c0_12] : memref<1x8x128xf32, #tpu.memory_space<vmem>>, vector<1x8x128xf32>
      tpu.vector_store %arg4[%c0_10, %c0_11, %c0_12], %18 {strides = array<i32>} : memref<1x8x128xf32, #tpu.memory_space<vmem>>, vector<1x8x128xf32>,
    } else {
    }
    return
  }
  func.func @transform_0(%arg0: i32, %arg1: i32) -> (i32, i32) {
    %c1_i32 = arith.constant 1 : i32
    %0 = arith.muli %arg0, %c1_i32 : i32
    %1 = arith.addi %0, %arg1 : i32
    %c0_i32 = arith.constant 0 : i32
    %2 = arith.minsi %1, %c0_i32 : i32
    %c0_i32_0 = arith.constant 0 : i32
    %c0_i32_1 = arith.constant 0 : i32
    return %2, %c0_i32_0 : i32, i32
  }
  func.func @transform_1(%arg0: i32, %arg1: i32) -> (i32, i32) {
    %c1_i32 = arith.constant 1 : i32
    %0 = arith.muli %arg0, %c1_i32 : i32
    %1 = arith.addi %0, %arg1 : i32
    %c0_i32 = arith.constant 0 : i32
    %2 = arith.minsi %1, %c0_i32 : i32
    %c0_i32_0 = arith.constant 0 : i32
    %c0_i32_1 = arith.constant 0 : i32
    return %2, %c0_i32_0 : i32, i32
  }
  func.func @transform_2(%arg0: i32, %arg1: i32) -> (i32, i32, i32) {
    %c0_i32 = arith.constant 0 : i32
    %c0_i32_0 = arith.constant 0 : i32
    %c0_i32_1 = arith.constant 0 : i32
    return %arg0, %c0_i32, %c0_i32_0 : i32, i32, i32
  }
}

module attributes {stable_mosaic.version = 11 : i64} {
  func.func @_rmse_kernel(%arg0: i32, %arg1: i32, %arg2: memref<16x128xf32, #tpu.memory_space<vmem>>, %arg3: memref<16x128xf32, #tpu.memory_space<vmem>>, %arg4: memref<1x8x128xf32, #tpu.memory_space<vmem>>, %arg5: memref<8x128xf32, #tpu.memory_space<vmem>>) attributes {dimension_semantics = [#tpu.dimension_semantics<parallel>, #tpu.dimension_semantics<arbitrary>], iteration_bounds = array<i64: 2, 1>, scalar_prefetch = 0 : i64, scratch_operands = 1 : i64, tpu.core_type = #tpu.core_type<tc>, window_params = [{transform_indices = @transform_0, window_bounds = array<i64: 16, 128>}, {transform_indices = @transform_1, window_bounds = array<i64: 16, 128>}, {transform_indices = @transform_2, window_bounds = array<i64: 1, 8, 128>}]} {
    %c0_i32 = arith.constant 0 : i32
    %0 = arith.cmpi eq, %arg1, %c0_i32 : i32
    %1 = arith.extui %0 : i1 to i32
    %c0_i32_0 = arith.constant 0 : i32
    %2 = arith.cmpi ne, %1, %c0_i32_0 : i32
    scf.if %2 {
      %cst = arith.constant 0.000000e+00 : f32
      %17 = vector.broadcast %cst : f32 to vector<8x128xf32>
      %c0 = arith.constant 0 : index
      %c0_9 = arith.constant 0 : index
      %18 = vector.load %arg5[%c0, %c0_9] : memref<8x128xf32, #tpu.memory_space<vmem>>, vector<8x128xf32>
      tpu.vector_store %arg5[%c0, %c0_9], %17 {strides = array<i32>} : memref<8x128xf32, #tpu.memory_space<vmem>>, vector<8x128xf32>,
    } else {
    }
    %c1_i32 = arith.constant 1 : i32
    %3 = arith.muli %arg0, %c1_i32 : i32
    %4 = arith.addi %3, %arg1 : i32
    %c16_i32 = arith.constant 16 : i32
    %5 = arith.muli %4, %c16_i32 : i32
    %c16_i32_1 = arith.constant 16 : i32
    %6 = arith.addi %5, %c16_i32_1 : i32
    %c16_i32_2 = arith.constant 16 : i32
    %7 = arith.cmpi sle, %6, %c16_i32_2 : i32
    %8 = arith.extui %7 : i1 to i32
    %c0_i32_3 = arith.constant 0 : i32
    %9 = arith.cmpi ne, %8, %c0_i32_3 : i32
    scf.if %9 {
      %c0 = arith.constant 0 : index
      %c0_9 = arith.constant 0 : index
      %17 = vector.load %arg3[%c0, %c0_9] : memref<16x128xf32, #tpu.memory_space<vmem>>, vector<16x128xf32>
      %c0_10 = arith.constant 0 : index
      %c0_11 = arith.constant 0 : index
      %18 = vector.load %arg2[%c0_10, %c0_11] : memref<16x128xf32, #tpu.memory_space<vmem>>, vector<16x128xf32>
      %19 = arith.subf %17, %18 : vector<16x128xf32>
      %c0_12 = arith.constant 0 : index
      %c0_13 = arith.constant 0 : index
      %20 = vector.load %arg5[%c0_12, %c0_13] : memref<8x128xf32, #tpu.memory_space<vmem>>, vector<8x128xf32>
      %21 = arith.mulf %19, %19 : vector<16x128xf32>
      %22 = vector.shape_cast %21 : vector<16x128xf32> to vector<2x8x128xf32>
      %cst = arith.constant dense<0.000000e+00> : vector<8x128xf32>
      %23 = vector.multi_reduction <add>, %22, %cst [0] : vector<2x8x128xf32> to vector<8x128xf32>
      %24 = arith.addf %20, %23 : vector<8x128xf32>
      %c0_14 = arith.constant 0 : index
      %c0_15 = arith.constant 0 : index
      %25 = vector.load %arg5[%c0_14, %c0_15] : memref<8x128xf32, #tpu.memory_space<vmem>>, vector<8x128xf32>
      tpu.vector_store %arg5[%c0_14, %c0_15], %24 {strides = array<i32>} : memref<8x128xf32, #tpu.memory_space<vmem>>, vector<8x128xf32>,
    } else {
    }
    %c16_i32_4 = arith.constant 16 : i32
    %10 = arith.addi %5, %c16_i32_4 : i32
    %c16_i32_5 = arith.constant 16 : i32
    %11 = arith.cmpi sgt, %10, %c16_i32_5 : i32
    %12 = arith.extui %11 : i1 to i32
    %c0_i32_6 = arith.constant 0 : i32
    %13 = arith.cmpi ne, %12, %c0_i32_6 : i32
    scf.if %13 {
      %17 = tpu.iota {dimensions = array<i32: 0>} : vector<16x128xi32>
      %18 = vector.broadcast %5 : i32 to vector<16x128xi32>
      %19 = arith.addi %17, %18 : vector<16x128xi32>
      %c0 = arith.constant 0 : index
      %c0_9 = arith.constant 0 : index
      %20 = vector.load %arg3[%c0, %c0_9] : memref<16x128xf32, #tpu.memory_space<vmem>>, vector<16x128xf32>
      %c0_10 = arith.constant 0 : index
      %c0_11 = arith.constant 0 : index
      %21 = vector.load %arg2[%c0_10, %c0_11] : memref<16x128xf32, #tpu.memory_space<vmem>>, vector<16x128xf32>
      %22 = arith.subf %20, %21 : vector<16x128xf32>
      %c16_i32_12 = arith.constant 16 : i32
      %23 = vector.broadcast %c16_i32_12 : i32 to vector<16x128xi32>
      %24 = arith.cmpi slt, %19, %23 : vector<16x128xi32>
      %cst = arith.constant 0.000000e+00 : f32
      %25 = vector.broadcast %cst : f32 to vector<16x128xf32>
      %26 = arith.select %24, %22, %25 : vector<16x128xi1>, vector<16x128xf32>
      %c0_13 = arith.constant 0 : index
      %c0_14 = arith.constant 0 : index
      %27 = vector.load %arg5[%c0_13, %c0_14] : memref<8x128xf32, #tpu.memory_space<vmem>>, vector<8x128xf32>
      %28 = arith.mulf %26, %26 : vector<16x128xf32>
      %29 = vector.shape_cast %28 : vector<16x128xf32> to vector<2x8x128xf32>
      %cst_15 = arith.constant dense<0.000000e+00> : vector<8x128xf32>
      %30 = vector.multi_reduction <add>, %29, %cst_15 [0] : vector<2x8x128xf32> to vector<8x128xf32>
      %31 = arith.addf %27, %30 : vector<8x128xf32>
      %c0_16 = arith.constant 0 : index
      %c0_17 = arith.constant 0 : index
      %32 = vector.load %arg5[%c0_16, %c0_17] : memref<8x128xf32, #tpu.memory_space<vmem>>, vector<8x128xf32>
      tpu.vector_store %arg5[%c0_16, %c0_17], %31 {strides = array<i32>} : memref<8x128xf32, #tpu.memory_space<vmem>>, vector<8x128xf32>,
    } else {
    }
    %c0_i32_7 = arith.constant 0 : i32
    %14 = arith.cmpi eq, %arg1, %c0_i32_7 : i32
    %15 = arith.extui %14 : i1 to i32
    %c0_i32_8 = arith.constant 0 : i32
    %16 = arith.cmpi ne, %15, %c0_i32_8 : i32
    scf.if %16 {
      %c0 = arith.constant 0 : index
      %c0_9 = arith.constant 0 : index
      %17 = vector.load %arg5[%c0, %c0_9] : memref<8x128xf32, #tpu.memory_space<vmem>>, vector<8x128xf32>
      %18 = vector.shape_cast %17 : vector<8x128xf32> to vector<1x8x128xf32>
      %c0_10 = arith.constant 0 : index
      %c0_11 = arith.constant 0 : index
      %c0_12 = arith.constant 0 : index
      %19 = vector.load %arg4[%c0_10, %c0_11, %c0_12] : memref<1x8x128xf32, #tpu.memory_space<vmem>>, vector<1x8x128xf32>
      tpu.vector_store %arg4[%c0_10, %c0_11, %c0_12], %18 {strides = array<i32>} : memref<1x8x128xf32, #tpu.memory_space<vmem>>, vector<1x8x128xf32>,
    } else {
    }
    return
  }
  func.func @transform_0(%arg0: i32, %arg1: i32) -> (i32, i32) {
    %c1_i32 = arith.constant 1 : i32
    %0 = arith.muli %arg0, %c1_i32 : i32
    %1 = arith.addi %0, %arg1 : i32
    %c0_i32 = arith.constant 0 : i32
    %2 = arith.minsi %1, %c0_i32 : i32
    %c0_i32_0 = arith.constant 0 : i32
    %c0_i32_1 = arith.constant 0 : i32
    return %2, %c0_i32_0 : i32, i32
  }
  func.func @transform_1(%arg0: i32, %arg1: i32) -> (i32, i32) {
    %c1_i32 = arith.constant 1 : i32
    %0 = arith.muli %arg0, %c1_i32 : i32
    %1 = arith.addi %0, %arg1 : i32
    %c0_i32 = arith.constant 0 : i32
    %2 = arith.minsi %1, %c0_i32 : i32
    %c0_i32_0 = arith.constant 0 : i32
    %c0_i32_1 = arith.constant 0 : i32
    return %2, %c0_i32_0 : i32, i32
  }
  func.func @transform_2(%arg0: i32, %arg1: i32) -> (i32, i32, i32) {
    %c0_i32 = arith.constant 0 : i32
    %c0_i32_0 = arith.constant 0 : i32
    %c0_i32_1 = arith.constant 0 : i32
    return %arg0, %c0_i32, %c0_i32_0 : i32, i32, i32
  }
}

</mosaic_0001>

<llo_original>
// kernel: tpu_custom_call.1
$region0: #{tpu_custom_call.1}
  #allocation0 [shape = 'u32[]', space=smem, size = 0x4, offset = 0x4, fixed_abs, tag = 'smem constant byte address 0x4 - core index']
  #allocation1 [shape = 'u32[72,128]{1,0:T(1,128)}', space=vmem, size = 0x9000, scoped, tag = 'internal scratch']
  #allocation2 [shape = 'f32[8,128]{1,0:T(8,128)}', space=vmem, size = 0x1000, scoped, tag = 'scratch operand']
  %s0 = inlined_call_operand.hbm [shape: f32[16,128], index: 0, kind: input, shape index: {}]
  %s1 = inlined_call_operand.hbm [shape: f32[16,128], index: 1, kind: input, shape index: {}]
  %s2 = inlined_call_operand.hbm [shape: f32[2,8,128], index: 2, kind: output, shape index: {}]
  %s3 = sld [smem:[#allocation0]]
  $region65: #{tpu_custom_call.1} parent=0
    _
  %s5 = ssub.s32 1, %s3
  %s6 = scalar_select 0, %s5, %s3
  $region1: #{tpu_custom_call.1} parent=0
    #allocation3 [shape = 'u8[16384]{0}', space=vmem, size = 0x4000, scoped, tag = 'input window, operand 0']
    #allocation4 [shape = 's32[2]{0}', space=sflag, size = 0x8, scoped, tag = 'scoped memory for tpu_custom_call.1']
    #allocation5 [shape = 's32[2]{0}', space=sflag, size = 0x8, scoped, tag = 'scoped memory for tpu_custom_call.1']
    #allocation6 [shape = 'u8[16384]{0}', space=vmem, size = 0x4000, scoped, tag = 'input window, operand 1']
    #allocation7 [shape = 's32[2]{0}', space=sflag, size = 0x8, scoped, tag = 'scoped memory for tpu_custom_call.1']
    #allocation8 [shape = 'u8[8192]{0}', space=vmem, size = 0x2000, scoped, tag = 'output window, operand 0']
    %7 = vsyncpa [#allocation4], 0
    %s8 = scalar_lea.sflag [#allocation4], 1
    %9 = vsyncpa %s8, 0
    %10 = vsyncpa [#allocation7], 0
    %s11 = scalar_lea.sflag [#allocation7], 1
    %12 = vsyncpa %s11, 0
    %13 = vsyncpa [#allocation5], 0
    %s14 = scalar_lea.sflag [#allocation5], 1
    %15 = vsyncpa %s14, 0
    loop: start=0, step=1, limit=4
    $region2: #{tpu_custom_call.1} parent=1 // loop_pre_header
      _
    $region3: #{tpu_custom_call.1} parent=1 // loop_header
      %s17 = sphi 0, %s21
      %p18 = scmp.ge.s32.totalorder %s17, 4
      %s24 = sphi 0, %s36
      %s25 = sphi 0, %s32
      %s26 = sphi 0, %s24
      %s27 = sphi 0, %s25
      %s28 = sphi 0, %s26
      %s29 = sphi 0, %s27
      %s45 = sphi 0, %s47
      %s48 = sphi 0, %s45
      %s49 = sphi 0, %s48
      %s65 = sphi 0, %s49
      %s77 = sphi 0, %s79
      %s80 = sphi 0, %s77
      %s81 = sphi 0, %s80
      %s97 = sphi 0, %s81
      %s103 = sphi 0, %s105
      %s106 = sphi 0, %s103
      %s107 = sphi 0, %s106
      %s123 = sphi 0, %s107
    $region4: #{tpu_custom_call.1} parent=1 // loop_header_branch
      %20 = sbr.rel (%p18) target = $region8
    $region5: #{tpu_custom_call.1} parent=1 // loop_body
      %s22 = ssub.s32 %s17, 1
      %s23 = ssub.s32 %s17, 2
      %s30 = sadd.s32 1, %s25
      %p31 = scmp.ge.s32.totalorder %s30, 1
      %s32 = scalar_select %p31, 0, %s30
      %s33 = sadd.s32 1, %s24
      %s34 = scalar_select %p31, %s33, %s24
      %p35 = scmp.ge.s32.totalorder %s34, 2
      %s36 = scalar_select %p35, 0, %s34
      %s37 = sadd.s32 %s24, %s25
      %p38 = scmp.lt.s32.totalorder %s37, 0
      %s39 = scalar_select %p38, %s37, 0
      %s40 = sadd.s32 %s36, %s32
      %p41 = scmp.lt.s32.totalorder %s40, 0
      %s42 = scalar_select %p41, %s40, 0
      %s43 = ssub.s32 %s39, %s42
      %p44 = scmp.eq.s32.totalorder %s43, 0
      %s46 = sadd.s32 %s45, 1
      %s47 = scalar_select %p44, %s45, %s46
      %p50 = pneg %p44
      %p51 = scmp.eq.s32.totalorder %s17, 1
      %p52 = por %p50, %p51
      %p53 = scmp.ne.s32.totalorder %s45, %s48
      %p54 = scmp.eq.s32.totalorder %s17, 0
      %p55 = por %p53, %p54
      %p56 = scmp.ne.s32.totalorder %s45, %s48
      %p57 = scmp.eq.s32.totalorder %s22, 1
      %p58 = por %p56, %p57
      %p59 = scmp.ne.s32.totalorder %s48, %s49
      %p60 = scmp.eq.s32.totalorder %s22, 0
      %p61 = por %p59, %p60
      %p62 = scmp.ne.s32.totalorder %s48, %s49
      %p63 = scmp.eq.s32.totalorder %s23, 1
      %p64 = por %p62, %p63
      %p66 = scmp.ne.s32.totalorder %s49, %s65
      %p67 = scmp.eq.s32.totalorder %s23, 0
      %p68 = por %p66, %p67
      %s69 = sadd.s32 %s24, %s25
      %p70 = scmp.lt.s32.totalorder %s69, 0
      %s71 = scalar_select %p70, %s69, 0
      %s72 = sadd.s32 %s36, %s32
      %p73 = scmp.lt.s32.totalorder %s72, 0
      %s74 = scalar_select %p73, %s72, 0
      %s75 = ssub.s32 %s71, %s74
      %p76 = scmp.eq.s32.totalorder %s75, 0
      %s78 = sadd.s32 %s77, 1
      %s79 = scalar_select %p76, %s77, %s78
      %p82 = pneg %p76
      %p83 = scmp.eq.s32.totalorder %s17, 1
      %p84 = por %p82, %p83
      %p85 = scmp.ne.s32.totalorder %s77, %s80
      %p86 = scmp.eq.s32.totalorder %s17, 0
      %p87 = por %p85, %p86
      %p88 = scmp.ne.s32.totalorder %s77, %s80
      %p89 = scmp.eq.s32.totalorder %s22, 1
      %p90 = por %p88, %p89
      %p91 = scmp.ne.s32.totalorder %s80, %s81
      %p92 = scmp.eq.s32.totalorder %s22, 0
      %p93 = por %p91, %p92
      %p94 = scmp.ne.s32.totalorder %s80, %s81
      %p95 = scmp.eq.s32.totalorder %s23, 1
      %p96 = por %p94, %p95
      %p98 = scmp.ne.s32.totalorder %s81, %s97
      %p99 = scmp.eq.s32.totalorder %s23, 0
      %p100 = por %p98, %p99
      %s101 = ssub.s32 %s24, %s36
      %p102 = scmp.eq.s32.totalorder %s101, 0
      %s104 = sadd.s32 %s103, 1
      %s105 = scalar_select %p102, %s103, %s104
      %p108 = pneg %p102
      %p109 = scmp.eq.s32.totalorder %s17, 1
      %p110 = por %p108, %p109
      %p111 = scmp.ne.s32.totalorder %s103, %s106
      %p112 = scmp.eq.s32.totalorder %s17, 0
      %p113 = por %p111, %p112
      %p114 = scmp.ne.s32.totalorder %s103, %s106
      %p115 = scmp.eq.s32.totalorder %s22, 1
      %p116 = por %p114, %p115
      %p117 = scmp.ne.s32.totalorder %s106, %s107
      %p118 = scmp.eq.s32.totalorder %s22, 0
      %p119 = por %p117, %p118
      %p120 = scmp.ne.s32.totalorder %s106, %s107
      %p121 = scmp.eq.s32.totalorder %s23, 1
      %p122 = por %p120, %p121
      %p124 = scmp.ne.s32.totalorder %s107, %s123
      %p125 = scmp.eq.s32.totalorder %s23, 0
      %p126 = por %p124, %p125
      %p127 = scmp.le.s32.totalorder 1, %s17
      %p128 = scmp.lt.s32.totalorder %s17, 3
      %p129 = pnand %p127, %p128
      %p130 = pneg %p129
      // Predicated region
      $region9: #{tpu_custom_call.1} parent=5 // pred_check
        _
      $region10: #{tpu_custom_call.1} parent=5 // pred_check_branch
        %132 = sbr.rel (%p129) target = $region12
      $region11: #{tpu_custom_call.1} parent=5 // pred_region
        %s133 = ssub.s32 %s17, 1
      $region12: #{tpu_custom_call.1} parent=5 // pred_fallthru
        _
      %p134 = scmp.lt.s32.totalorder %s17, 2
      // Predicated region
      $region13: #{tpu_custom_call.1} parent=5 // pred_check
        %p135 = pneg %p134
      $region14: #{tpu_custom_call.1} parent=5 // pred_check_branch
        %137 = sbr.rel (%p135) target = $region16
      $region15: #{tpu_custom_call.1} parent=5 // pred_region
        // Predicated region
        $region17: #{tpu_custom_call.1} parent=15 // pred_check
          %p138 = pneg %p55
        $region18: #{tpu_custom_call.1} parent=15 // pred_check_branch
          %140 = sbr.rel (%p138) target = $region20
        $region19: #{tpu_custom_call.1} parent=15 // pred_region
          %s141 = sand.u32 %s45, 1
          %s142 = scalar_lea.sflag [#allocation4], %s141
          %s143 = sand.u32 %s45, 1
          %s144 = smul.addr %s143, 16
          %s145 = scalar_lea.vmem [#allocation3], %s144
          %s146 = sadd.s32 %s24, %s25
          %p147 = scmp.lt.s32.totalorder %s146, 0
          %s148 = scalar_select %p147, %s146, 0
          %s149 = smul.u32 2, %s148
          %151 = vsyncadd %s142, 0
          %s152 = smul.addr %s149, 8
          %s153 = scalar_lea.hbm %s0, %s152
          %s154 = sshll.u32 %s153, 4
          %s155 = int_to_ptr.hbm [resolvable:$true] %s154
          %s156 = sshll.u32 %s145, 4
          %s157 = int_to_ptr.vmem [resolvable:$true] %s156
          %162 = dma.hbm_to_vmem [thread:$0]  %s155, 256, %s157, %s142, 128, 128, 8
        $region20: #{tpu_custom_call.1} parent=15 // pred_fallthru
          _
        // Predicated region
        $region21: #{tpu_custom_call.1} parent=15 // pred_check
          %p163 = pneg %p87
        $region22: #{tpu_custom_call.1} parent=15 // pred_check_branch
          %165 = sbr.rel (%p163) target = $region24
        $region23: #{tpu_custom_call.1} parent=15 // pred_region
          %s166 = sand.u32 %s77, 1
          %s167 = scalar_lea.sflag [#allocation7], %s166
          %s168 = sand.u32 %s77, 1
          %s169 = smul.addr %s168, 16
          %s170 = scalar_lea.vmem [#allocation6], %s169
          %s171 = sadd.s32 %s24, %s25
          %p172 = scmp.lt.s32.totalorder %s171, 0
          %s173 = scalar_select %p172, %s171, 0
          %s174 = smul.u32 2, %s173
          %176 = vsyncadd %s167, 0
          %s177 = smul.addr %s174, 8
          %s178 = scalar_lea.hbm %s1, %s177
          %s179 = sshll.u32 %s178, 4
          %s180 = int_to_ptr.hbm [resolvable:$true] %s179
          %s181 = sshll.u32 %s170, 4
          %s182 = int_to_ptr.vmem [resolvable:$true] %s181
          %187 = dma.hbm_to_vmem [thread:$0]  %s180, 256, %s182, %s167, 128, 128, 8
        $region24: #{tpu_custom_call.1} parent=15 // pred_fallthru
          _
      $region16: #{tpu_custom_call.1} parent=5 // pred_fallthru
        _
      %p188 = scmp.le.s32.totalorder 1, %s17
      %p189 = scmp.lt.s32.totalorder %s17, 3
      %p190 = pnand %p188, %p189
      %p191 = pneg %p190
      // Predicated region
      $region25: #{tpu_custom_call.1} parent=5 // pred_check
        _
      $region26: #{tpu_custom_call.1} parent=5 // pred_check_branch
        %193 = sbr.rel (%p190) target = $region28
      $region27: #{tpu_custom_call.1} parent=5 // pred_region
        %s194 = ssub.s32 %s17, 1
        %s195 = sand.u32 %s48, 1
        %s196 = scalar_lea.sflag [#allocation4], %s195
        %s197 = sand.u32 %s48, 1
        %s198 = smul.addr %s197, 16
        %s199 = scalar_lea.vmem [#allocation3], %s198
        // Predicated region
        $region29: #{tpu_custom_call.1} parent=27 // pred_check
          %p200 = pneg %p61
        $region30: #{tpu_custom_call.1} parent=27 // pred_check_branch
          %202 = sbr.rel (%p200) target = $region32
        $region31: #{tpu_custom_call.1} parent=27 // pred_region
          %204 = dma.done %s196, 256
        $region32: #{tpu_custom_call.1} parent=27 // pred_fallthru
          _
        %s205 = sand.u32 %s80, 1
        %s206 = scalar_lea.sflag [#allocation7], %s205
        %s207 = sand.u32 %s80, 1
        %s208 = smul.addr %s207, 16
        %s209 = scalar_lea.vmem [#allocation6], %s208
        // Predicated region
        $region33: #{tpu_custom_call.1} parent=27 // pred_check
          %p210 = pneg %p93
        $region34: #{tpu_custom_call.1} parent=27 // pred_check_branch
          %212 = sbr.rel (%p210) target = $region36
        $region35: #{tpu_custom_call.1} parent=27 // pred_region
          %214 = dma.done %s206, 256
        $region36: #{tpu_custom_call.1} parent=27 // pred_fallthru
          _
        %s215 = sand.u32 %s48, 1
        %s216 = scalar_lea.sflag [#allocation4], %s215
        %s217 = sand.u32 %s48, 1
        %s218 = smul.addr %s217, 16
        %s219 = scalar_lea.vmem [#allocation3], %s218
        %p220 = pneg %p61
        %p221 = pneg %p58
        %s222 = sand.u32 %s80, 1
        %s223 = scalar_lea.sflag [#allocation7], %s222
        %s224 = sand.u32 %s80, 1
        %s225 = smul.addr %s224, 16
        %s226 = scalar_lea.vmem [#allocation6], %s225
        %p227 = pneg %p93
        %p228 = pneg %p90
        %p229 = pneg %p119
        %p230 = pneg %p116
        %s231 = sand.u32 %s106, 1
        %s232 = scalar_lea.sflag [#allocation5], %s231
        %s233 = sand.u32 %s106, 1
        %s234 = smul.addr %s233, 8
        %s235 = scalar_lea.vmem [#allocation8], %s234
        %s236 = sadd.s32 %s26, %s27
        %p237 = scmp.lt.s32.totalorder %s236, 0
        %s238 = scalar_select %p237, %s236, 0
        %s239 = smul.u32 2, %s238
        %s240 = sadd.s32 %s26, %s27
        %p241 = scmp.lt.s32.totalorder %s240, 0
        %s242 = scalar_select %p241, %s240, 0
        %s243 = smul.u32 2, %s242
        %p244 = scmp.eq.s32.totalorder %s27, 0
        // Predicated region
        $region37: #{tpu_custom_call.1} parent=27 // pred_check
          %p245 = pneg %p244
        $region38: #{tpu_custom_call.1} parent=27 // pred_check_branch
          %247 = sbr.rel (%p245) target = $region40
        $region39: #{tpu_custom_call.1} parent=27 // pred_region
          %248 = vst [vmem:[#allocation2] sm:$0xff] 0.0
        $region40: #{tpu_custom_call.1} parent=27 // pred_fallthru
          _
        %s249 = sadd.s32 %s26, %s27
        %s250 = smul.u32 %s249, 16
        %s251 = sadd.s32 %s250, 16
        %p252 = scmp.le.s32.totalorder %s251, 16
        // Predicated region
        $region41: #{tpu_custom_call.1} parent=27 // pred_check
          %p253 = pneg %p252
        $region42: #{tpu_custom_call.1} parent=27 // pred_check_branch
          %255 = sbr.rel (%p253) target = $region44
        $region43: #{tpu_custom_call.1} parent=27 // pred_region
          %v256 = vld [vmem:[%s209] sm:$0xff]
          %v257 = vld [vmem:[%s209 + $0x8] sm:$0xff]
          %v258 = vld [vmem:[%s199] sm:$0xff]
          %v259 = vld [vmem:[%s199 + $0x8] sm:$0xff]
          %v260 = vsub.f32 %v256, %v258
          %v261 = vsub.f32 %v257, %v259
          %v262 = vld [vmem:[#allocation2] sm:$0xff]
          %v263 = vmul.f32 %v260, %v260
          %v264 = vmul.f32 %v261, %v261
          %v265 = vadd.f32 %v263, %v264
          %v266 = vadd.f32 %v262, %v265
          %267 = vst [vmem:[#allocation2] sm:$0xff] %v266
        $region44: #{tpu_custom_call.1} parent=27 // pred_fallthru
          _
        %p268 = scmp.gt.s32.totalorder %s251, 16
        // Predicated region
        $region45: #{tpu_custom_call.1} parent=27 // pred_check
          %p269 = pneg %p268
        $region46: #{tpu_custom_call.1} parent=27 // pred_check_branch
          %271 = sbr.rel (%p269) target = $region48
        $region47: #{tpu_custom_call.1} parent=27 // pred_region
          %v272 = vlaneseq
          %v273 = vshrl.u32 %v272, 7
          %v274 = vadd.s32 %v273, 8
          %v275 = vstv %s250
          %v276 = vadd.s32 %v273, %v275
          %v277 = vadd.s32 %v274, %v275
          %v278 = vld [vmem:[%s209] sm:$0xff]
          %v279 = vld [vmem:[%s209 + $0x8] sm:$0xff]
          %v280 = vld [vmem:[%s199] sm:$0xff]
          %v281 = vld [vmem:[%s199 + $0x8] sm:$0xff]
          %v282 = vsub.f32 %v278, %v280
          %v283 = vsub.f32 %v279, %v281
          %vm284 = vcmp.lt.s32.totalorder %v276, 16
          %vm285 = vcmp.lt.s32.totalorder %v277, 16
          %v286 = vsel %vm284, %v282, 0.0
          %v287 = vsel %vm285, %v283, 0.0
          %v288 = vld [vmem:[#allocation2] sm:$0xff]
          %v289 = vmul.f32 %v286, %v286
          %v290 = vmul.f32 %v287, %v287
          %v291 = vadd.f32 %v289, %v290
          %v292 = vadd.f32 %v288, %v291
          %293 = vst [vmem:[#allocation2] sm:$0xff] %v292
        $region48: #{tpu_custom_call.1} parent=27 // pred_fallthru
          _
        // Predicated region
        $region49: #{tpu_custom_call.1} parent=27 // pred_check
          %p294 = pneg %p244
        $region50: #{tpu_custom_call.1} parent=27 // pred_check_branch
          %296 = sbr.rel (%p294) target = $region52
        $region51: #{tpu_custom_call.1} parent=27 // pred_region
          %v297 = vld [vmem:[#allocation2] sm:$0xff]
          %298 = vst [vmem:[%s235] sm:$0xff] %v297
        $region52: #{tpu_custom_call.1} parent=27 // pred_fallthru
          _
        %s299 = sand.u32 %s106, 1
        %s300 = scalar_lea.sflag [#allocation5], %s299
        %s301 = sand.u32 %s106, 1
        %s302 = smul.addr %s301, 8
        %s303 = scalar_lea.vmem [#allocation8], %s302
        // Predicated region
        $region53: #{tpu_custom_call.1} parent=27 // pred_check
          %p304 = pneg %p116
        $region54: #{tpu_custom_call.1} parent=27 // pred_check_branch
          %306 = sbr.rel (%p304) target = $region56
        $region55: #{tpu_custom_call.1} parent=27 // pred_region
          %308 = vsyncadd %s300, 0
          %s309 = smul.addr %s26, 8
          %s310 = scalar_lea.hbm %s2, %s309
          %s312 = sshll.u32 %s303, 4
          %s313 = int_to_ptr.vmem [resolvable:$true] %s312
          %s314 = sshll.u32 %s310, 4
          %s315 = int_to_ptr.hbm [resolvable:$true] %s314
          %317 = dma.vmem_to_hbm [thread:$0]  %s313, 128, %s315, %s300
        $region56: #{tpu_custom_call.1} parent=27 // pred_fallthru
          _
      $region28: #{tpu_custom_call.1} parent=5 // pred_fallthru
        _
      %p318 = scmp.le.s32.totalorder 2, %s17
      // Predicated region
      $region57: #{tpu_custom_call.1} parent=5 // pred_check
        %p319 = pneg %p318
      $region58: #{tpu_custom_call.1} parent=5 // pred_check_branch
        %321 = sbr.rel (%p319) target = $region60
      $region59: #{tpu_custom_call.1} parent=5 // pred_region
        %s322 = ssub.s32 %s17, 2
        // Predicated region
        $region61: #{tpu_custom_call.1} parent=59 // pred_check
          %p323 = pneg %p122
        $region62: #{tpu_custom_call.1} parent=59 // pred_check_branch
          %325 = sbr.rel (%p323) target = $region64
        $region63: #{tpu_custom_call.1} parent=59 // pred_region
          %s326 = sand.u32 %s107, 1
          %s327 = scalar_lea.sflag [#allocation5], %s326
          %s328 = sand.u32 %s107, 1
          %s329 = smul.addr %s328, 8
          %s330 = scalar_lea.vmem [#allocation8], %s329
          %332 = dma.done %s327, 128
        $region64: #{tpu_custom_call.1} parent=59 // pred_fallthru
          _
      $region60: #{tpu_custom_call.1} parent=5 // pred_fallthru
        _
    $region6: #{tpu_custom_call.1} parent=1 // loop_footer
      %s21 = sadd.s32 1, %s17
    $region7: #{tpu_custom_call.1} parent=1 // loop_footer_branch
      %16 = sbr.rel target = $region3
    $region8: #{tpu_custom_call.1} parent=1 // loop_exit
      _
    %333 = vsyncpa [#allocation4], 1
    %s334 = scalar_lea.sflag [#allocation4], 1
    %335 = vsyncpa %s334, 1
    %336 = vsyncpa [#allocation7], 1
    %s337 = scalar_lea.sflag [#allocation7], 1
    %338 = vsyncpa %s337, 1
    %339 = vsyncpa [#allocation5], 1
    %s340 = scalar_lea.sflag [#allocation5], 1
    %341 = vsyncpa %s340, 1

</llo_original>
